<compile_context>
chip_gen: v7x
topology: tpu7x:2x2x1
jax: 0.10.0
libtpu: 0.0.40
codegen_flags: <defaults>
</compile_context>

<pallas_src>
import math

import numpy as np
import jax
import jax.numpy as jnp
from jax.experimental import pallas as pl
from jax.experimental.pallas import tpu as pltpu


# ---------------------------------------------------------------------------
# Host-side parameter / operator construction (plain numpy glue)
# ---------------------------------------------------------------------------

def gaussian_kernel_1d(sigma: float, truncate: int = 3) -> np.ndarray:
    """Matches deepgaze GaussianFilterNd: K = 2*ceil(truncate*sigma)+1, normalized."""
    k_size = int(2 * math.ceil(truncate * sigma) + 1)
    grid = np.arange(k_size, dtype=np.float32) - (k_size - 1) / 2.0
    kern = np.exp(-0.5 * (grid / np.float32(sigma)) ** 2)
    kern = kern / kern.sum()
    return kern.astype(np.float32)


def gaussian_replicate_matrix(n: int, kern: np.ndarray) -> np.ndarray:
    """(n, n) matrix implementing 1-D conv with `kern` and replicate padding."""
    K = kern.shape[0]
    p = (K - 1) // 2
    M = np.zeros((n, n), np.float64)
    for i in range(n):
        for t in range(K):
            j = min(max(i - p + t, 0), n - 1)
            M[i, j] += float(kern[t])
    return M.astype(np.float32)


def nearest_indices_for_size(in_size: int, out_size: int) -> np.ndarray:
    """PyTorch F.interpolate(mode='nearest', size=...): src = floor(dst*in/out)."""
    idx = (np.arange(out_size) * in_size) // out_size
    return np.minimum(idx, in_size - 1)


def nearest_indices_for_scale(in_size: int, out_size: int, inv_scale: float) -> np.ndarray:
    """PyTorch F.interpolate(mode='nearest', scale_factor=s, recompute=False):
    src = floor(dst / s) = floor(dst * inv_scale)."""
    idx = np.floor(np.arange(out_size) * inv_scale).astype(np.int64)
    return np.minimum(idx, in_size - 1)


def one_hot_matrix(idx: np.ndarray, in_size: int) -> np.ndarray:
    m = np.zeros((len(idx), in_size), np.float32)
    m[np.arange(len(idx)), idx] = 1.0
    return m


def _pick_w_tile(W: int, target: int = 512) -> int:
    """Largest multiple-of-128 divisor of W that is <= target; else the full W."""
    if W % 128 != 0:
        return W
    wt = min(W, target)
    wt -= wt % 128
    while W % wt != 0:
        wt -= 128
    return wt


# ---------------------------------------------------------------------------
# Pallas kernel: one (batch, W-tile) step
# ---------------------------------------------------------------------------

def finalizer_kernel(lh_ref, rwT_ref, logc_ref, uwT_ref, uh_ref,
                     readout_ref, cb_ref, out_ref):
    r = readout_ref[0]                                                   # (Hr, Wr)
    # fused nearest-resize + separable Gaussian (two small MXU matmuls)
    y = jnp.dot(lh_ref[...], r, preferred_element_type=jnp.float32)     # (h_ds, Wr)
    y = jnp.dot(y, rwT_ref[...], preferred_element_type=jnp.float32)    # (h_ds, w_ds)
    # weighted center bias (already downscaled & weighted in the wrapper)
    y = y + cb_ref[0]
    # exact logsumexp of the full-res map, computed at low res: each low-res
    # cell is replicated count[i,j] times -> weight by log(count).
    z = y + logc_ref[...]
    m = jnp.max(z)
    lse = m + jnp.log(jnp.sum(jnp.exp(z - m)))
    yn = y - lse                                                         # (h_ds, w_ds)
    # nearest upsample: W (lane) then H (sublane), both as one-hot MXU matmuls,
    # producing a dense (H, Wt) block -> unmasked full-width stores.
    yw = jnp.dot(yn, uwT_ref[...], preferred_element_type=jnp.float32)  # (h_ds, Wt)
    full = jnp.dot(uh_ref[...], yw, preferred_element_type=jnp.float32) # (H, Wt)
    out_ref[0] = full.astype(out_ref.dtype)


# ---------------------------------------------------------------------------
# Wrapper
# ---------------------------------------------------------------------------

def finalizer_forward(readout, centerbias, *, sigma=2.0, center_bias_weight=1.0,
                      saliency_map_factor=4, truncate=3, out_dtype=jnp.float32,
                      w_tile_target=512):
    B, C, Hr, Wr = readout.shape
    assert C == 1, "Finalizer reads channel 0 of a single-channel readout"
    Bc, H, W = centerbias.shape
    assert Bc == B

    h_ds = int(math.floor(H / saliency_map_factor))
    w_ds = int(math.floor(W / saliency_map_factor))

    # --- folded operators (numpy, host side) --------------------------------
    kern = gaussian_kernel_1d(sigma, truncate)
    G_h = gaussian_replicate_matrix(h_ds, kern)
    G_w = gaussian_replicate_matrix(w_ds, kern)
    S_rh = one_hot_matrix(nearest_indices_for_size(Hr, h_ds), Hr)       # (h_ds, Hr)
    S_rw = one_hot_matrix(nearest_indices_for_size(Wr, w_ds), Wr)       # (w_ds, Wr)
    Lh = jnp.asarray(G_h @ S_rh)                                        # (h_ds, Hr)
    RwT = jnp.asarray((G_w @ S_rw).T)                                   # (Wr, w_ds)

    # nearest-upsample indices + per-cell repeat counts (exact normalization).
    # up_h / up_w are the single source for both the one-hot operators and log_count.
    up_h = nearest_indices_for_size(h_ds, H)                            # (H,)
    up_w = nearest_indices_for_size(w_ds, W)                            # (W,)
    c_h = np.bincount(up_h, minlength=h_ds).astype(np.float64)
    c_w = np.bincount(up_w, minlength=w_ds).astype(np.float64)
    assert c_h.min() >= 1 and c_w.min() >= 1, \
        "nearest upsample must cover every low-res cell (log_count would be -inf)"
    log_count = jnp.asarray((np.log(c_h)[:, None] + np.log(c_w)[None, :]).astype(np.float32))
    UwT = jnp.asarray(one_hot_matrix(up_w, w_ds).T)                     # (w_ds, W)
    Uh = jnp.asarray(one_hot_matrix(up_h, h_ds))                        # (H, h_ds)

    # --- wrapper-side glue ---------------------------------------------------
    readout3 = readout[:, 0, :, :].astype(jnp.float32)                  # (B, Hr, Wr)

    f = float(saliency_map_factor)
    if f.is_integer():
        # nearest with integer scale factor == plain strided slice (cheap strided
        # copy instead of two gathers over the full (B, H, W) centerbias).
        s = int(f)
        cb_ds = centerbias.astype(jnp.float32)[:, ::s, ::s][:, :h_ds, :w_ds]
    else:
        idx_h_cb = nearest_indices_for_scale(H, h_ds, saliency_map_factor)
        idx_w_cb = nearest_indices_for_scale(W, w_ds, saliency_map_factor)
        cb_ds = centerbias.astype(jnp.float32)[:, idx_h_cb][:, :, idx_w_cb]
    cb_ds = jnp.float32(center_bias_weight) * cb_ds                     # (B, h_ds, w_ds)

    # --- grid: (batch, W tiles) — both parallel (v7x megacore at B=1) --------
    Wt = _pick_w_tile(W, w_tile_target)
    nw = W // Wt

    in_specs = [
        pl.BlockSpec((h_ds, Hr), lambda b, j: (0, 0)),                  # Lh (grid-invariant)
        pl.BlockSpec((Wr, w_ds), lambda b, j: (0, 0)),                  # RwT
        pl.BlockSpec((h_ds, w_ds), lambda b, j: (0, 0)),                # log repeat counts
        pl.BlockSpec((w_ds, Wt), lambda b, j: (0, j)),                  # UwT (W tile)
        pl.BlockSpec((H, h_ds), lambda b, j: (0, 0)),                   # Uh
        pl.BlockSpec((1, Hr, Wr), lambda b, j: (b, 0, 0)),              # readout
        pl.BlockSpec((1, h_ds, w_ds), lambda b, j: (b, 0, 0)),          # weighted ds centerbias
    ]
    out_spec = pl.BlockSpec((1, H, Wt), lambda b, j: (b, 0, j))

    out = pl.pallas_call(
        finalizer_kernel,
        out_shape=jax.ShapeDtypeStruct((B, H, W), out_dtype),
        grid=(B, nw),
        in_specs=in_specs,
        out_specs=out_spec,
        compiler_params=pltpu.CompilerParams(
            dimension_semantics=("parallel", "parallel")),
    )(Lh, RwT, log_count, UwT, Uh, readout3, cb_ds)

    return out


# ---------------------------------------------------------------------------
# Demo / self-check
# ---------------------------------------------------------------------------

if __name__ == "__main__":
    key = jax.random.PRNGKey(0)
    k1, k2 = jax.random.split(key)

    B, Hr, Wr = 2, 16, 16          # small single-channel readout
    H, W = 128, 128                # stimulus / centerbias size (lane-dense output)
    sigma, cbw, factor = 2.0, 1.0, 4

    readout = jax.random.normal(k1, (B, 1, Hr, Wr), dtype=jnp.float32)
    centerbias = jax.random.normal(k2, (B, H, W), dtype=jnp.float32)

    out = finalizer_forward(readout, centerbias, sigma=sigma,
                            center_bias_weight=cbw, saliency_map_factor=factor)
    out = jax.block_until_ready(out)

    assert out.shape == (B, H, W) and out.dtype == jnp.float32
    # output is a per-image log-density -> exp sums to 1 over space
    sums = jnp.exp(out).sum(axis=(1, 2))
    assert bool(jnp.allclose(sums, 1.0, atol=1e-3)), sums

    # independent un-fused full-resolution reference (float64) of the same forward
    h_ds, w_ds = H // factor, W // factor
    kern = gaussian_kernel_1d(sigma, 3)
    G_h = gaussian_replicate_matrix(h_ds, kern).astype(np.float64)
    G_w = gaussian_replicate_matrix(w_ds, kern).astype(np.float64)
    S_rh = one_hot_matrix(nearest_indices_for_size(Hr, h_ds), Hr).astype(np.float64)
    S_rw = one_hot_matrix(nearest_indices_for_size(Wr, w_ds), Wr).astype(np.float64)
    U_h = one_hot_matrix(nearest_indices_for_size(h_ds, H), h_ds).astype(np.float64)
    U_w = one_hot_matrix(nearest_indices_for_size(w_ds, W), w_ds).astype(np.float64)
    idx_h = nearest_indices_for_scale(H, h_ds, factor)
    idx_w = nearest_indices_for_scale(W, w_ds, factor)

    r_np = np.asarray(readout[:, 0], dtype=np.float64)
    cb_np = np.asarray(centerbias, dtype=np.float64)
    r1 = np.einsum('ih,bhw,jw->bij', S_rh, r_np, S_rw)          # nearest resize
    r2 = np.einsum('ki,bij,lj->bkl', G_h, r1, G_w)              # gaussian H then W
    low = r2 + cbw * cb_np[:, idx_h][:, :, idx_w]               # + weighted centerbias
    full = np.einsum('Ik,bkl,Jl->bIJ', U_h, low, U_w)           # nearest upsample
    m = full.max(axis=(1, 2), keepdims=True)
    lse = m + np.log(np.exp(full - m).sum(axis=(1, 2), keepdims=True))
    ref = (full - lse).astype(np.float32)

    assert np.allclose(np.asarray(out), ref, atol=2e-3), float(np.abs(np.asarray(out) - ref).max())

    print("KERNEL_OK")
</pallas_src>

<mosaic_0001>
module attributes {stable_mosaic.version = 11 : i64} {
  func.func @finalizer_kernel(%arg0: i32, %arg1: i32, %arg2: memref<32x16xf32, #tpu.memory_space<vmem>>, %arg3: memref<16x32xf32, #tpu.memory_space<vmem>>, %arg4: memref<32x32xf32, #tpu.memory_space<vmem>>, %arg5: memref<32x128xf32, #tpu.memory_space<vmem>>, %arg6: memref<128x32xf32, #tpu.memory_space<vmem>>, %arg7: memref<1x16x16xf32, #tpu.memory_space<vmem>>, %arg8: memref<1x32x32xf32, #tpu.memory_space<vmem>>, %arg9: memref<1x128x128xf32, #tpu.memory_space<vmem>>) attributes {dimension_semantics = [#tpu.dimension_semantics<parallel>, #tpu.dimension_semantics<parallel>], iteration_bounds = array<i64: 2, 1>, scalar_prefetch = 0 : i64, scratch_operands = 0 : i64, tpu.core_type = #tpu.core_type<tc>, window_params = [{pipeline_mode = #tpu.pipeline_mode<synchronous>, transform_indices = @transform_0, window_bounds = array<i64: 32, 16>}, {pipeline_mode = #tpu.pipeline_mode<synchronous>, transform_indices = @transform_1, window_bounds = array<i64: 16, 32>}, {pipeline_mode = #tpu.pipeline_mode<synchronous>, transform_indices = @transform_2, window_bounds = array<i64: 32, 32>}, {transform_indices = @transform_3, window_bounds = array<i64: 32, 128>}, {pipeline_mode = #tpu.pipeline_mode<synchronous>, transform_indices = @transform_4, window_bounds = array<i64: 128, 32>}, {transform_indices = @transform_5, window_bounds = array<i64: 1, 16, 16>}, {transform_indices = @transform_6, window_bounds = array<i64: 1, 32, 32>}, {transform_indices = @transform_7, window_bounds = array<i64: 1, 128, 128>}]} {
    %c0 = arith.constant 0 : index
    %c0_0 = arith.constant 0 : index
    %c0_1 = arith.constant 0 : index
    %0 = vector.load %arg7[%c0, %c0_0, %c0_1] : memref<1x16x16xf32, #tpu.memory_space<vmem>>, vector<1x16x16xf32>
    %1 = vector.shape_cast %0 : vector<1x16x16xf32> to vector<16x16xf32>
    %c0_2 = arith.constant 0 : index
    %c0_3 = arith.constant 0 : index
    %2 = vector.load %arg2[%c0_2, %c0_3] : memref<32x16xf32, #tpu.memory_space<vmem>>, vector<32x16xf32>
    %cst = arith.constant dense<0.000000e+00> : vector<32x16xf32>
    %3 = tpu.matmul %2, %1, %cst {dimension_numbers = #tpu.dot_dimension_numbers<[1], [0], [0], [1], [0, 0, 1, 1], [], []>} : vector<32x16xf32>, vector<16x16xf32>, vector<32x16xf32> -> vector<32x16xf32>
    %c0_4 = arith.constant 0 : index
    %c0_5 = arith.constant 0 : index
    %4 = vector.load %arg3[%c0_4, %c0_5] : memref<16x32xf32, #tpu.memory_space<vmem>>, vector<16x32xf32>
    %cst_6 = arith.constant dense<0.000000e+00> : vector<32x32xf32>
    %5 = tpu.matmul %3, %4, %cst_6 {dimension_numbers = #tpu.dot_dimension_numbers<[1], [0], [0], [1], [0, 0, 1, 1], [], []>} : vector<32x16xf32>, vector<16x32xf32>, vector<32x32xf32> -> vector<32x32xf32>
    %c0_7 = arith.constant 0 : index
    %c0_8 = arith.constant 0 : index
    %c0_9 = arith.constant 0 : index
    %6 = vector.load %arg8[%c0_7, %c0_8, %c0_9] : memref<1x32x32xf32, #tpu.memory_space<vmem>>, vector<1x32x32xf32>
    %7 = vector.shape_cast %6 : vector<1x32x32xf32> to vector<32x32xf32>
    %8 = arith.addf %5, %7 : vector<32x32xf32>
    %c0_10 = arith.constant 0 : index
    %c0_11 = arith.constant 0 : index
    %9 = vector.load %arg4[%c0_10, %c0_11] : memref<32x32xf32, #tpu.memory_space<vmem>>, vector<32x32xf32>
    %10 = arith.addf %8, %9 : vector<32x32xf32>
    %11 = vector.shape_cast %10 : vector<32x32xf32> to vector<1x32x32xf32>
    %cst_12 = arith.constant dense<0xFF800000> : vector<1xf32>
    %12 = vector.multi_reduction <maximumf>, %11, %cst_12 [1, 2] : vector<1x32x32xf32> to vector<1xf32>
    %13 = vector.shape_cast %12 : vector<1xf32> to vector<1x1x1xf32>
    %14 = vector.extract %13[0, 0, 0] : f32 from vector<1x1x1xf32>
    %15 = vector.broadcast %14 : f32 to vector<32x32xf32>
    %16 = arith.subf %10, %15 : vector<32x32xf32>
    %17 = math.exp %16 : vector<32x32xf32>
    %18 = vector.shape_cast %17 : vector<32x32xf32> to vector<1x32x32xf32>
    %cst_13 = arith.constant dense<0.000000e+00> : vector<1xf32>
    %19 = vector.multi_reduction <add>, %18, %cst_13 [1, 2] : vector<1x32x32xf32> to vector<1xf32>
    %20 = vector.shape_cast %19 : vector<1xf32> to vector<1x1x1xf32>
    %21 = vector.extract %20[0, 0, 0] : f32 from vector<1x1x1xf32>
    %22 = math.log %21 : f32
    %23 = arith.addf %14, %22 : f32
    %24 = vector.broadcast %23 : f32 to vector<32x32xf32>
    %25 = arith.subf %8, %24 : vector<32x32xf32>
    %c0_14 = arith.constant 0 : index
    %c0_15 = arith.constant 0 : index
    %26 = vector.load %arg5[%c0_14, %c0_15] : memref<32x128xf32, #tpu.memory_space<vmem>>, vector<32x128xf32>
    %cst_16 = arith.constant dense<0.000000e+00> : vector<32x128xf32>
    %27 = tpu.matmul %25, %26, %cst_16 {dimension_numbers = #tpu.dot_dimension_numbers<[1], [0], [0], [1], [0, 0, 1, 1], [], []>} : vector<32x32xf32>, vector<32x128xf32>, vector<32x128xf32> -> vector<32x128xf32>
    %c0_17 = arith.constant 0 : index
    %c0_18 = arith.constant 0 : index
    %28 = vector.load %arg6[%c0_17, %c0_18] : memref<128x32xf32, #tpu.memory_space<vmem>>, vector<128x32xf32>
    %cst_19 = arith.constant dense<0.000000e+00> : vector<128x128xf32>
    %29 = tpu.matmul %28, %27, %cst_19 {dimension_numbers = #tpu.dot_dimension_numbers<[1], [0], [0], [1], [0, 0, 1, 1], [], []>} : vector<128x32xf32>, vector<32x128xf32>, vector<128x128xf32> -> vector<128x128xf32>
    %c0_20 = arith.constant 0 : index
    %c0_21 = arith.constant 0 : index
    %c0_22 = arith.constant 0 : index
    %30 = vector.load %arg9[%c0_20, %c0_21, %c0_22] : memref<1x128x128xf32, #tpu.memory_space<vmem>>, vector<1x128x128xf32>
    %31 = vector.shape_cast %30 : vector<1x128x128xf32> to vector<128x128xf32>
    %32 = vector.shape_cast %29 : vector<128x128xf32> to vector<1x128x128xf32>
    tpu.vector_store %arg9[%c0_20, %c0_21, %c0_22], %32 {strides = array<i32>} : memref<1x128x128xf32, #tpu.memory_space<vmem>>, vector<1x128x128xf32>,
    return
  }
  func.func @transform_0(%arg0: i32, %arg1: i32) -> (i32, i32) {
    %c0_i32 = arith.constant 0 : i32
    %c0_i32_0 = arith.constant 0 : i32
    %c0_i32_1 = arith.constant 0 : i32
    return %c0_i32, %c0_i32_0 : i32, i32
  }
  func.func @transform_1(%arg0: i32, %arg1: i32) -> (i32, i32) {
    %c0_i32 = arith.constant 0 : i32
    %c0_i32_0 = arith.constant 0 : i32
    %c0_i32_1 = arith.constant 0 : i32
    return %c0_i32, %c0_i32_0 : i32, i32
  }
  func.func @transform_2(%arg0: i32, %arg1: i32) -> (i32, i32) {
    %c0_i32 = arith.constant 0 : i32
    %c0_i32_0 = arith.constant 0 : i32
    %c0_i32_1 = arith.constant 0 : i32
    return %c0_i32, %c0_i32_0 : i32, i32
  }
  func.func @transform_3(%arg0: i32, %arg1: i32) -> (i32, i32) {
    %c0_i32 = arith.constant 0 : i32
    %c0_i32_0 = arith.constant 0 : i32
    return %c0_i32, %arg1 : i32, i32
  }
  func.func @transform_4(%arg0: i32, %arg1: i32) -> (i32, i32) {
    %c0_i32 = arith.constant 0 : i32
    %c0_i32_0 = arith.constant 0 : i32
    %c0_i32_1 = arith.constant 0 : i32
    return %c0_i32, %c0_i32_0 : i32, i32
  }
  func.func @transform_5(%arg0: i32, %arg1: i32) -> (i32, i32, i32) {
    %c0_i32 = arith.constant 0 : i32
    %c0_i32_0 = arith.constant 0 : i32
    %c0_i32_1 = arith.constant 0 : i32
    return %arg0, %c0_i32, %c0_i32_0 : i32, i32, i32
  }
  func.func @transform_6(%arg0: i32, %arg1: i32) -> (i32, i32, i32) {
    %c0_i32 = arith.constant 0 : i32
    %c0_i32_0 = arith.constant 0 : i32
    %c0_i32_1 = arith.constant 0 : i32
    return %arg0, %c0_i32, %c0_i32_0 : i32, i32, i32
  }
  func.func @transform_7(%arg0: i32, %arg1: i32) -> (i32, i32, i32) {
    %c0_i32 = arith.constant 0 : i32
    %c0_i32_0 = arith.constant 0 : i32
    return %arg0, %c0_i32, %arg1 : i32, i32, i32
  }
}

</mosaic_0001>

<llo_original>
// kernel: tpu_custom_call.1
$region0: #{tpu_custom_call.1}
  #allocation0 [shape = 'u32[]', space=smem, size = 0x4, offset = 0x4, fixed_abs, tag = 'smem constant byte address 0x4 - core index']
  #allocation1 [shape = 'u32[144,128]{1,0:T(1,128)}', space=vmem, size = 0x12000, scoped, tag = 'internal scratch']
  %s0 = inlined_call_operand.vmem [shape: f32[32,16], index: 0, kind: input, shape index: {}]
  %s1 = inlined_call_operand.vmem [shape: f32[16,32], index: 1, kind: input, shape index: {}]
  %s2 = inlined_call_operand.vmem [shape: f32[32,32], index: 2, kind: input, shape index: {}]
  %s3 = inlined_call_operand.vmem [shape: f32[32,128], index: 3, kind: input, shape index: {}]
  %s4 = inlined_call_operand.vmem [shape: f32[128,32], index: 4, kind: input, shape index: {}]
  %s5 = inlined_call_operand.vmem [shape: f32[2,16,16], index: 5, kind: input, shape index: {}]
  %s6 = inlined_call_operand.vmem [shape: f32[2,32,32], index: 6, kind: input, shape index: {}]
  %s7 = inlined_call_operand.hbm [shape: f32[2,128,128], index: 7, kind: output, shape index: {}]
  %s8 = sld [smem:[#allocation0]]
  $region61: #{tpu_custom_call.1} parent=0
    _
  %s10 = ssub.s32 1, %s8
  %s11 = scalar_select 0, %s10, %s8
  $region1: #{tpu_custom_call.1} parent=0
    #allocation2 [shape = 'u8[131072]{0}', space=vmem, size = 0x20000, scoped, tag = 'output window, operand 0']
    #allocation3 [shape = 's32[2]{0}', space=sflag, size = 0x8, scoped, tag = 'scoped memory for tpu_custom_call.1']
    %12 = vsyncpa [#allocation3], 0
    %s13 = scalar_lea.sflag [#allocation3], 1
    %14 = vsyncpa %s13, 0
    loop: start=0, step=1, limit=4
    $region2: #{tpu_custom_call.1} parent=1 // loop_pre_header
      _
    $region3: #{tpu_custom_call.1} parent=1 // loop_header
      %s16 = sphi 0, %s20
      %p17 = scmp.ge.s32.totalorder %s16, 4
      %s23 = sphi 0, %s35
      %s24 = sphi 0, %s31
      %s25 = sphi 0, %s23
      %s26 = sphi 0, %s24
      %s27 = sphi 0, %s25
      %s28 = sphi 0, %s26
      %s36 = sphi 0, %s36
      %s38 = sphi 0, %s36
      %s39 = sphi 0, %s38
      %s53 = sphi 0, %s39
      %s57 = sphi 0, %s57
      %s59 = sphi 0, %s57
      %s60 = sphi 0, %s59
      %s74 = sphi 0, %s60
      %s78 = sphi 0, %s78
      %s80 = sphi 0, %s78
      %s81 = sphi 0, %s80
      %s95 = sphi 0, %s81
      %s101 = sphi 0, %s103
      %s104 = sphi 0, %s101
      %s105 = sphi 0, %s104
      %s121 = sphi 0, %s105
      %s125 = sphi 0, %s125
      %s127 = sphi 0, %s125
      %s128 = sphi 0, %s127
      %s142 = sphi 0, %s128
      %s148 = sphi 0, %s150
      %s151 = sphi 0, %s148
      %s152 = sphi 0, %s151
      %s168 = sphi 0, %s152
      %s174 = sphi 0, %s176
      %s177 = sphi 0, %s174
      %s178 = sphi 0, %s177
      %s194 = sphi 0, %s178
      %s202 = sphi 0, %s204
      %s205 = sphi 0, %s202
      %s206 = sphi 0, %s205
      %s222 = sphi 0, %s206
    $region4: #{tpu_custom_call.1} parent=1 // loop_header_branch
      %19 = sbr.rel (%p17) target = $region8
    $region5: #{tpu_custom_call.1} parent=1 // loop_body
      %s21 = ssub.s32 %s16, 1
      %s22 = ssub.s32 %s16, 2
      %s29 = sadd.s32 1, %s24
      %p30 = scmp.ge.s32.totalorder %s29, 1
      %s31 = scalar_select %p30, 0, %s29
      %s32 = sadd.s32 1, %s23
      %s33 = scalar_select %p30, %s32, %s23
      %p34 = scmp.ge.s32.totalorder %s33, 2
      %s35 = scalar_select %p34, 0, %s33
      %s37 = sadd.s32 %s36, 1
      %p40 = scmp.eq.s32.totalorder %s16, 1
      %p41 = scmp.ne.s32.totalorder %s36, %s38
      %p42 = scmp.eq.s32.totalorder %s16, 0
      %p43 = por %p41, %p42
      %p44 = scmp.ne.s32.totalorder %s36, %s38
      %p45 = scmp.eq.s32.totalorder %s21, 1
      %p46 = por %p44, %p45
      %p47 = scmp.ne.s32.totalorder %s38, %s39
      %p48 = scmp.eq.s32.totalorder %s21, 0
      %p49 = por %p47, %p48
      %p50 = scmp.ne.s32.totalorder %s38, %s39
      %p51 = scmp.eq.s32.totalorder %s22, 1
      %p52 = por %p50, %p51
      %p54 = scmp.ne.s32.totalorder %s39, %s53
      %p55 = scmp.eq.s32.totalorder %s22, 0
      %p56 = por %p54, %p55
      %s58 = sadd.s32 %s57, 1
      %p61 = scmp.eq.s32.totalorder %s16, 1
      %p62 = scmp.ne.s32.totalorder %s57, %s59
      %p63 = scmp.eq.s32.totalorder %s16, 0
      %p64 = por %p62, %p63
      %p65 = scmp.ne.s32.totalorder %s57, %s59
      %p66 = scmp.eq.s32.totalorder %s21, 1
      %p67 = por %p65, %p66
      %p68 = scmp.ne.s32.totalorder %s59, %s60
      %p69 = scmp.eq.s32.totalorder %s21, 0
      %p70 = por %p68, %p69
      %p71 = scmp.ne.s32.totalorder %s59, %s60
      %p72 = scmp.eq.s32.totalorder %s22, 1
      %p73 = por %p71, %p72
      %p75 = scmp.ne.s32.totalorder %s60, %s74
      %p76 = scmp.eq.s32.totalorder %s22, 0
      %p77 = por %p75, %p76
      %s79 = sadd.s32 %s78, 1
      %p82 = scmp.eq.s32.totalorder %s16, 1
      %p83 = scmp.ne.s32.totalorder %s78, %s80
      %p84 = scmp.eq.s32.totalorder %s16, 0
      %p85 = por %p83, %p84
      %p86 = scmp.ne.s32.totalorder %s78, %s80
      %p87 = scmp.eq.s32.totalorder %s21, 1
      %p88 = por %p86, %p87
      %p89 = scmp.ne.s32.totalorder %s80, %s81
      %p90 = scmp.eq.s32.totalorder %s21, 0
      %p91 = por %p89, %p90
      %p92 = scmp.ne.s32.totalorder %s80, %s81
      %p93 = scmp.eq.s32.totalorder %s22, 1
      %p94 = por %p92, %p93
      %p96 = scmp.ne.s32.totalorder %s81, %s95
      %p97 = scmp.eq.s32.totalorder %s22, 0
      %p98 = por %p96, %p97
      %s99 = ssub.s32 %s24, %s31
      %p100 = scmp.eq.s32.totalorder %s99, 0
      %s102 = sadd.s32 %s101, 1
      %s103 = scalar_select %p100, %s101, %s102
      %p106 = pneg %p100
      %p107 = scmp.eq.s32.totalorder %s16, 1
      %p108 = por %p106, %p107
      %p109 = scmp.ne.s32.totalorder %s101, %s104
      %p110 = scmp.eq.s32.totalorder %s16, 0
      %p111 = por %p109, %p110
      %p112 = scmp.ne.s32.totalorder %s101, %s104
      %p113 = scmp.eq.s32.totalorder %s21, 1
      %p114 = por %p112, %p113
      %p115 = scmp.ne.s32.totalorder %s104, %s105
      %p116 = scmp.eq.s32.totalorder %s21, 0
      %p117 = por %p115, %p116
      %p118 = scmp.ne.s32.totalorder %s104, %s105
      %p119 = scmp.eq.s32.totalorder %s22, 1
      %p120 = por %p118, %p119
      %p122 = scmp.ne.s32.totalorder %s105, %s121
      %p123 = scmp.eq.s32.totalorder %s22, 0
      %p124 = por %p122, %p123
      %s126 = sadd.s32 %s125, 1
      %p129 = scmp.eq.s32.totalorder %s16, 1
      %p130 = scmp.ne.s32.totalorder %s125, %s127
      %p131 = scmp.eq.s32.totalorder %s16, 0
      %p132 = por %p130, %p131
      %p133 = scmp.ne.s32.totalorder %s125, %s127
      %p134 = scmp.eq.s32.totalorder %s21, 1
      %p135 = por %p133, %p134
      %p136 = scmp.ne.s32.totalorder %s127, %s128
      %p137 = scmp.eq.s32.totalorder %s21, 0
      %p138 = por %p136, %p137
      %p139 = scmp.ne.s32.totalorder %s127, %s128
      %p140 = scmp.eq.s32.totalorder %s22, 1
      %p141 = por %p139, %p140
      %p143 = scmp.ne.s32.totalorder %s128, %s142
      %p144 = scmp.eq.s32.totalorder %s22, 0
      %p145 = por %p143, %p144
      %s146 = ssub.s32 %s23, %s35
      %p147 = scmp.eq.s32.totalorder %s146, 0
      %s149 = sadd.s32 %s148, 1
      %s150 = scalar_select %p147, %s148, %s149
      %p153 = pneg %p147
      %p154 = scmp.eq.s32.totalorder %s16, 1
      %p155 = por %p153, %p154
      %p156 = scmp.ne.s32.totalorder %s148, %s151
      %p157 = scmp.eq.s32.totalorder %s16, 0
      %p158 = por %p156, %p157
      %p159 = scmp.ne.s32.totalorder %s148, %s151
      %p160 = scmp.eq.s32.totalorder %s21, 1
      %p161 = por %p159, %p160
      %p162 = scmp.ne.s32.totalorder %s151, %s152
      %p163 = scmp.eq.s32.totalorder %s21, 0
      %p164 = por %p162, %p163
      %p165 = scmp.ne.s32.totalorder %s151, %s152
      %p166 = scmp.eq.s32.totalorder %s22, 1
      %p167 = por %p165, %p166
      %p169 = scmp.ne.s32.totalorder %s152, %s168
      %p170 = scmp.eq.s32.totalorder %s22, 0
      %p171 = por %p169, %p170
      %s172 = ssub.s32 %s23, %s35
      %p173 = scmp.eq.s32.totalorder %s172, 0
      %s175 = sadd.s32 %s174, 1
      %s176 = scalar_select %p173, %s174, %s175
      %p179 = pneg %p173
      %p180 = scmp.eq.s32.totalorder %s16, 1
      %p181 = por %p179, %p180
      %p182 = scmp.ne.s32.totalorder %s174, %s177
      %p183 = scmp.eq.s32.totalorder %s16, 0
      %p184 = por %p182, %p183
      %p185 = scmp.ne.s32.totalorder %s174, %s177
      %p186 = scmp.eq.s32.totalorder %s21, 1
      %p187 = por %p185, %p186
      %p188 = scmp.ne.s32.totalorder %s177, %s178
      %p189 = scmp.eq.s32.totalorder %s21, 0
      %p190 = por %p188, %p189
      %p191 = scmp.ne.s32.totalorder %s177, %s178
      %p192 = scmp.eq.s32.totalorder %s22, 1
      %p193 = por %p191, %p192
      %p195 = scmp.ne.s32.totalorder %s178, %s194
      %p196 = scmp.eq.s32.totalorder %s22, 0
      %p197 = por %p195, %p196
      %s198 = ssub.s32 %s23, %s35
      %s199 = ssub.s32 %s24, %s31
      %s200 = sor.u32 %s198, %s199
      %p201 = scmp.eq.s32.totalorder %s200, 0
      %s203 = sadd.s32 %s202, 1
      %s204 = scalar_select %p201, %s202, %s203
      %p207 = pneg %p201
      %p208 = scmp.eq.s32.totalorder %s16, 1
      %p209 = por %p207, %p208
      %p210 = scmp.ne.s32.totalorder %s202, %s205
      %p211 = scmp.eq.s32.totalorder %s16, 0
      %p212 = por %p210, %p211
      %p213 = scmp.ne.s32.totalorder %s202, %s205
      %p214 = scmp.eq.s32.totalorder %s21, 1
      %p215 = por %p213, %p214
      %p216 = scmp.ne.s32.totalorder %s205, %s206
      %p217 = scmp.eq.s32.totalorder %s21, 0
      %p218 = por %p216, %p217
      %p219 = scmp.ne.s32.totalorder %s205, %s206
      %p220 = scmp.eq.s32.totalorder %s22, 1
      %p221 = por %p219, %p220
      %p223 = scmp.ne.s32.totalorder %s206, %s222
      %p224 = scmp.eq.s32.totalorder %s22, 0
      %p225 = por %p223, %p224
      %p226 = scmp.le.s32.totalorder 1, %s16
      %p227 = scmp.lt.s32.totalorder %s16, 3
      %p228 = pnand %p226, %p227
      %p229 = pneg %p228
      // Predicated region
      $region9: #{tpu_custom_call.1} parent=5 // pred_check
        _
      $region10: #{tpu_custom_call.1} parent=5 // pred_check_branch
        %231 = sbr.rel (%p228) target = $region12
      $region11: #{tpu_custom_call.1} parent=5 // pred_region
        %s232 = ssub.s32 %s16, 1
        // Predicated region
        $region13: #{tpu_custom_call.1} parent=11 // pred_check
          %p233 = pneg %p49
        $region14: #{tpu_custom_call.1} parent=11 // pred_check_branch
          %235 = sbr.rel (%p233) target = $region16
        $region15: #{tpu_custom_call.1} parent=11 // pred_region
          _
        $region16: #{tpu_custom_call.1} parent=11 // pred_fallthru
          _
        // Predicated region
        $region17: #{tpu_custom_call.1} parent=11 // pred_check
          %p236 = pneg %p70
        $region18: #{tpu_custom_call.1} parent=11 // pred_check_branch
          %238 = sbr.rel (%p236) target = $region20
        $region19: #{tpu_custom_call.1} parent=11 // pred_region
          _
        $region20: #{tpu_custom_call.1} parent=11 // pred_fallthru
          _
        // Predicated region
        $region21: #{tpu_custom_call.1} parent=11 // pred_check
          %p239 = pneg %p91
        $region22: #{tpu_custom_call.1} parent=11 // pred_check_branch
          %241 = sbr.rel (%p239) target = $region24
        $region23: #{tpu_custom_call.1} parent=11 // pred_region
          _
        $region24: #{tpu_custom_call.1} parent=11 // pred_fallthru
          _
        // Predicated region
        $region25: #{tpu_custom_call.1} parent=11 // pred_check
          %p242 = pneg %p117
        $region26: #{tpu_custom_call.1} parent=11 // pred_check_branch
          %244 = sbr.rel (%p242) target = $region28
        $region27: #{tpu_custom_call.1} parent=11 // pred_region
          %p245 = scmp.lt.s32.totalorder %s26, 0
          %s246 = scalar_select %p245, %s26, 0
          %s247 = smul.addr %s246, 8
          %s248 = scalar_lea.vmem %s3, %s247
        $region28: #{tpu_custom_call.1} parent=11 // pred_fallthru
          _
        // Predicated region
        $region29: #{tpu_custom_call.1} parent=11 // pred_check
          %p249 = pneg %p138
        $region30: #{tpu_custom_call.1} parent=11 // pred_check_branch
          %251 = sbr.rel (%p249) target = $region32
        $region31: #{tpu_custom_call.1} parent=11 // pred_region
          _
        $region32: #{tpu_custom_call.1} parent=11 // pred_fallthru
          _
      $region12: #{tpu_custom_call.1} parent=5 // pred_fallthru
        _
      %p252 = scmp.lt.s32.totalorder %s16, 2
      // Predicated region
      $region33: #{tpu_custom_call.1} parent=5 // pred_check
        %p253 = pneg %p252
      $region34: #{tpu_custom_call.1} parent=5 // pred_check_branch
        %255 = sbr.rel (%p253) target = $region36
      $region35: #{tpu_custom_call.1} parent=5 // pred_region
        // Predicated region
        $region37: #{tpu_custom_call.1} parent=35 // pred_check
          %p256 = pneg %p158
        $region38: #{tpu_custom_call.1} parent=35 // pred_check_branch
          %258 = sbr.rel (%p256) target = $region40
        $region39: #{tpu_custom_call.1} parent=35 // pred_region
          %p259 = scmp.lt.s32.totalorder %s23, 1
          %s260 = scalar_select %p259, %s23, 1
          %s261 = smul.addr %s260, 2
          %s262 = smul.addr %s261, 8
          %s263 = scalar_lea.vmem %s5, %s262
        $region40: #{tpu_custom_call.1} parent=35 // pred_fallthru
          _
        // Predicated region
        $region41: #{tpu_custom_call.1} parent=35 // pred_check
          %p264 = pneg %p184
        $region42: #{tpu_custom_call.1} parent=35 // pred_check_branch
          %266 = sbr.rel (%p264) target = $region44
        $region43: #{tpu_custom_call.1} parent=35 // pred_region
          %p267 = scmp.lt.s32.totalorder %s23, 1
          %s268 = scalar_select %p267, %s23, 1
          %s269 = smul.addr %s268, 4
          %s270 = smul.addr %s269, 8
          %s271 = scalar_lea.vmem %s6, %s270
        $region44: #{tpu_custom_call.1} parent=35 // pred_fallthru
          _
      $region36: #{tpu_custom_call.1} parent=5 // pred_fallthru
        _
      %p272 = scmp.le.s32.totalorder 1, %s16
      %p273 = scmp.lt.s32.totalorder %s16, 3
      %p274 = pnand %p272, %p273
      %p275 = pneg %p274
      // Predicated region
      $region45: #{tpu_custom_call.1} parent=5 // pred_check
        _
      $region46: #{tpu_custom_call.1} parent=5 // pred_check_branch
        %277 = sbr.rel (%p274) target = $region48
      $region47: #{tpu_custom_call.1} parent=5 // pred_region
        %s278 = ssub.s32 %s16, 1
        %p279 = pneg %p49
        %p280 = pneg %p46
        %p281 = pneg %p70
        %p282 = pneg %p67
        %p283 = pneg %p91
        %p284 = pneg %p88
        %p285 = scmp.lt.s32.totalorder %s26, 0
        %s286 = scalar_select %p285, %s26, 0
        %s287 = smul.addr %s286, 8
        %s288 = scalar_lea.vmem %s3, %s287
        %p289 = pneg %p117
        %p290 = pneg %p114
        %p291 = pneg %p138
        %p292 = pneg %p135
        %p293 = scmp.lt.s32.totalorder %s25, 1
        %s294 = scalar_select %p293, %s25, 1
        %s295 = smul.addr %s294, 2
        %s296 = smul.addr %s295, 8
        %s297 = scalar_lea.vmem %s5, %s296
        %p298 = pneg %p164
        %p299 = pneg %p161
        %p300 = scmp.lt.s32.totalorder %s25, 1
        %s301 = scalar_select %p300, %s25, 1
        %s302 = smul.addr %s301, 4
        %s303 = smul.addr %s302, 8
        %s304 = scalar_lea.vmem %s6, %s303
        %p305 = pneg %p190
        %p306 = pneg %p187
        %p307 = pneg %p218
        %p308 = pneg %p215
        %s309 = sand.u32 %s205, 1
        %s310 = scalar_lea.sflag [#allocation3], %s309
        %s311 = sand.u32 %s205, 1
        %s312 = smul.addr %s311, 128
        %s313 = scalar_lea.vmem [#allocation2], %s312
        %p314 = scmp.lt.s32.totalorder %s26, 0
        %s315 = scalar_select %p314, %s26, 0
        %s316 = smul.addr %s315, 8
        %s317 = scalar_lea.vmem %s3, %s316
        %p318 = scmp.lt.s32.totalorder %s25, 1
        %s319 = scalar_select %p318, %s25, 1
        %s320 = smul.addr %s319, 2
        %s321 = smul.addr %s320, 8
        %s322 = scalar_lea.vmem %s5, %s321
        %p323 = scmp.lt.s32.totalorder %s25, 1
        %s324 = scalar_select %p323, %s25, 1
        %s325 = smul.addr %s324, 4
        %s326 = smul.addr %s325, 8
        %s327 = scalar_lea.vmem %s6, %s326
        %v328 = vld [vmem:[%s322] sm:$0xff]
        %v329 = vld [vmem:[%s322 + $0x8] sm:$0xff]
        %v330 = vld [vmem:[%s0] sm:$0xff]
        %v331 = vld [vmem:[%s0 + $0x8] sm:$0xff]
        %v332 = vld [vmem:[%s0 + $0x10] sm:$0xff]
        %v333 = vld [vmem:[%s0 + $0x18] sm:$0xff]
        %vm334 = vcmask 130048
        %v336 = vsel %vm334, %v330, 0
        %v339 = vsel %vm334, %v331, 0
        %v342 = vsel %vm334, %v332, 0
        %v345 = vsel %vm334, %v333, 0
        %347 = vmatprep.subr.mxu0 0.0
        %348 = vmatpush1.msra.mxu0 %v328
        %349 = vmatprep.subr.mxu0 0.0
        %350 = vmatpush1.msra.mxu0 %v329
        %351 = vmatprep.subr.mxu0 0.0
        %352 = vmatpush1.msra.mxu0 0.0
        %353 = vmatprep.subr.mxu0 0.0
        %354 = vmatpush1.msra.mxu0 0.0
        %355 = vmatprep.subr.mxu0 0.0
        %356 = vmatpush1.msra.mxu0 0.0
        %357 = vmatprep.subr.mxu0 0.0
        %358 = vmatpush1.msra.mxu0 0.0
        %359 = vmatprep.subr.mxu0 0.0
        %360 = vmatpush1.msra.mxu0 0.0
        %361 = vmatprep.subr.mxu0 0.0
        %362 = vmatpush1.msra.mxu0 0.0
        %363 = vmatprep.subr.mxu0 0.0
        %364 = vmatpush1.msra.mxu0 0.0
        %365 = vmatprep.subr.mxu0 0.0
        %366 = vmatpush1.msra.mxu0 0.0
        %367 = vmatprep.subr.mxu0 0.0
        %368 = vmatpush1.msra.mxu0 0.0
        %369 = vmatprep.subr.mxu0 0.0
        %370 = vmatpush1.msra.mxu0 0.0
        %371 = vmatprep.subr.mxu0 0.0
        %372 = vmatpush1.msra.mxu0 0.0
        %373 = vmatprep.subr.mxu0 0.0
        %374 = vmatpush1.msra.mxu0 0.0
        %375 = vmatprep.subr.mxu0 0.0
        %376 = vmatpush1.msra.mxu0 0.0
        %377 = vmatprep.subr.mxu0 0.0
        %378 = vmatpush1.msra.mxu0 0.0
        %379 = vmatprep.subr.mxu0 0.0
        %380 = vmatpush1.msra.mxu0 0.0
        %381 = vmatprep.subr.mxu0 0.0
        %382 = vmatpush1.msra.mxu0 0.0
        %383 = vmatprep.subr.mxu0 0.0
        %384 = vmatpush1.msra.mxu0 0.0
        %385 = vmatprep.subr.mxu0 0.0
        %386 = vmatpush1.msra.mxu0 0.0
        %387 = vmatprep.subr.mxu0 0.0
        %388 = vmatpush1.msra.mxu0 0.0
        %389 = vmatprep.subr.mxu0 0.0
        %390 = vmatpush1.msra.mxu0 0.0
        %391 = vmatprep.subr.mxu0 0.0
        %392 = vmatpush1.msra.mxu0 0.0
        %393 = vmatprep.subr.mxu0 0.0
        %394 = vmatpush1.msra.mxu0 0.0
        %395 = vmatprep.subr.mxu0 0.0
        %396 = vmatpush1.msra.mxu0 0.0
        %397 = vmatprep.subr.mxu0 0.0
        %398 = vmatpush1.msra.mxu0 0.0
        %399 = vmatprep.subr.mxu0 0.0
        %400 = vmatpush1.msra.mxu0 0.0
        %401 = vmatprep.subr.mxu0 0.0
        %402 = vmatpush1.msra.mxu0 0.0
        %403 = vmatprep.subr.mxu0 0.0
        %404 = vmatpush1.msra.mxu0 0.0
        %405 = vmatprep.subr.mxu0 0.0
        %406 = vmatpush1.msra.mxu0 0.0
        %407 = vmatprep.subr.mxu0 0.0
        %408 = vmatpush1.msra.mxu0 0.0
        %409 = vmatprep.subr.mxu0 0.0
        %410 = vmatpush1.msra.mxu0 0.0
        %411 = vmatprep.mubr.f32.mxu0 0.0
        %412 = vmatmul.mubr.f32.gmra.mrb[0].mxu0 %v336
        %v413 = vpop.f32.mrb[0].mxu0
        %v414 = vadd.f32 0.0, %v413
        %v415 = vpop.f32.mrb[0].mxu0
        %416 = vmatprep.mubr.f32.mxu0 0.0
        %417 = vmatmul.mubr.f32.gmra.mrb[0].mxu0 %v339
        %v418 = vpop.f32.mrb[0].mxu0
        %v419 = vadd.f32 0.0, %v418
        %v420 = vpop.f32.mrb[0].mxu0
        %421 = vmatprep.mubr.f32.mxu0 0.0
        %422 = vmatmul.mubr.f32.gmra.mrb[0].mxu0 %v342
        %v423 = vpop.f32.mrb[0].mxu0
        %v424 = vadd.f32 0.0, %v423
        %v425 = vpop.f32.mrb[0].mxu0
        %426 = vmatprep.mubr.f32.mxu0 0.0
        %427 = vmatmul.mubr.f32.gmra.mrb[0].mxu0 %v345
        %v428 = vpop.f32.mrb[0].mxu0
        %v429 = vadd.f32 0.0, %v428
        %v430 = vpop.f32.mrb[0].mxu0
        %431 = vdwg.mxu0
        %v432 = vld [vmem:[%s1] sm:$0xff]
        %v433 = vld [vmem:[%s1 + $0x8] sm:$0xff]
        %v434 = vld [vmem:[%s327] sm:$0xff]
        %v435 = vld [vmem:[%s327 + $0x8] sm:$0xff]
        %v436 = vld [vmem:[%s327 + $0x10] sm:$0xff]
        %v437 = vld [vmem:[%s327 + $0x18] sm:$0xff]
        %v439 = vsel %vm334, %v414, 0
        %v442 = vsel %vm334, %v419, 0
        %v445 = vsel %vm334, %v424, 0
        %v448 = vsel %vm334, %v429, 0
        %450 = vmatprep.subr.mxu0 0.0
        %451 = vmatpush1.msra.mxu0 %v432
        %452 = vmatprep.subr.mxu0 0.0
        %453 = vmatpush1.msra.mxu0 %v433
        %454 = vmatprep.subr.mxu0 0.0
        %455 = vmatpush1.msra.mxu0 0.0
        %456 = vmatprep.subr.mxu0 0.0
        %457 = vmatpush1.msra.mxu0 0.0
        %458 = vmatprep.subr.mxu0 0.0
        %459 = vmatpush1.msra.mxu0 0.0
        %460 = vmatprep.subr.mxu0 0.0
        %461 = vmatpush1.msra.mxu0 0.0
        %462 = vmatprep.subr.mxu0 0.0
        %463 = vmatpush1.msra.mxu0 0.0
        %464 = vmatprep.subr.mxu0 0.0
        %465 = vmatpush1.msra.mxu0 0.0
        %466 = vmatprep.subr.mxu0 0.0
        %467 = vmatpush1.msra.mxu0 0.0
        %468 = vmatprep.subr.mxu0 0.0
        %469 = vmatpush1.msra.mxu0 0.0
        %470 = vmatprep.subr.mxu0 0.0
        %471 = vmatpush1.msra.mxu0 0.0
        %472 = vmatprep.subr.mxu0 0.0
        %473 = vmatpush1.msra.mxu0 0.0
        %474 = vmatprep.subr.mxu0 0.0
        %475 = vmatpush1.msra.mxu0 0.0
        %476 = vmatprep.subr.mxu0 0.0
        %477 = vmatpush1.msra.mxu0 0.0
        %478 = vmatprep.subr.mxu0 0.0
        %479 = vmatpush1.msra.mxu0 0.0
        %480 = vmatprep.subr.mxu0 0.0
        %481 = vmatpush1.msra.mxu0 0.0
        %482 = vmatprep.subr.mxu0 0.0
        %483 = vmatpush1.msra.mxu0 0.0
        %484 = vmatprep.subr.mxu0 0.0
        %485 = vmatpush1.msra.mxu0 0.0
        %486 = vmatprep.subr.mxu0 0.0
        %487 = vmatpush1.msra.mxu0 0.0
        %488 = vmatprep.subr.mxu0 0.0
        %489 = vmatpush1.msra.mxu0 0.0
        %490 = vmatprep.subr.mxu0 0.0
        %491 = vmatpush1.msra.mxu0 0.0
        %492 = vmatprep.subr.mxu0 0.0
        %493 = vmatpush1.msra.mxu0 0.0
        %494 = vmatprep.subr.mxu0 0.0
        %495 = vmatpush1.msra.mxu0 0.0
        %496 = vmatprep.subr.mxu0 0.0
        %497 = vmatpush1.msra.mxu0 0.0
        %498 = vmatprep.subr.mxu0 0.0
        %499 = vmatpush1.msra.mxu0 0.0
        %500 = vmatprep.subr.mxu0 0.0
        %501 = vmatpush1.msra.mxu0 0.0
        %502 = vmatprep.subr.mxu0 0.0
        %503 = vmatpush1.msra.mxu0 0.0
        %504 = vmatprep.subr.mxu0 0.0
        %505 = vmatpush1.msra.mxu0 0.0
        %506 = vmatprep.subr.mxu0 0.0
        %507 = vmatpush1.msra.mxu0 0.0
        %508 = vmatprep.subr.mxu0 0.0
        %509 = vmatpush1.msra.mxu0 0.0
        %510 = vmatprep.subr.mxu0 0.0
        %511 = vmatpush1.msra.mxu0 0.0
        %512 = vmatprep.subr.mxu0 0.0
        %513 = vmatpush1.msra.mxu0 0.0
        %514 = vmatprep.mubr.f32.mxu0 0.0
        %515 = vmatmul.mubr.f32.gmra.mrb[0].mxu0 %v439
        %v516 = vpop.f32.mrb[0].mxu0
        %v517 = vadd.f32 %v434, %v516
        %v518 = vpop.f32.mrb[0].mxu0
        %519 = vmatprep.mubr.f32.mxu0 0.0
        %520 = vmatmul.mubr.f32.gmra.mrb[0].mxu0 %v442
        %v521 = vpop.f32.mrb[0].mxu0
        %v522 = vadd.f32 %v435, %v521
        %v523 = vpop.f32.mrb[0].mxu0
        %524 = vmatprep.mubr.f32.mxu0 0.0
        %525 = vmatmul.mubr.f32.gmra.mrb[0].mxu0 %v445
        %v526 = vpop.f32.mrb[0].mxu0
        %v527 = vadd.f32 %v436, %v526
        %v528 = vpop.f32.mrb[0].mxu0
        %529 = vmatprep.mubr.f32.mxu0 0.0
        %530 = vmatmul.mubr.f32.gmra.mrb[0].mxu0 %v448
        %v531 = vpop.f32.mrb[0].mxu0
        %v532 = vadd.f32 %v437, %v531
        %v533 = vpop.f32.mrb[0].mxu0
        %534 = vdwg.mxu0
        %v535 = vld [vmem:[%s2] sm:$0xff]
        %v536 = vld [vmem:[%s2 + $0x8] sm:$0xff]
        %v537 = vld [vmem:[%s2 + $0x10] sm:$0xff]
        %v538 = vld [vmem:[%s2 + $0x18] sm:$0xff]
        %v539 = vadd.f32 %v517, %v535
        %v540 = vadd.f32 %v522, %v536
        %v541 = vadd.f32 %v527, %v537
        %v542 = vadd.f32 %v532, %v538
        %vm543 = vcmask 261120
        %v544 = vsel %vm543, %v539, -inf
        %v545 = vsel %vm543, %v540, -inf
        %v546 = vsel %vm543, %v541, -inf
        %v547 = vsel %vm543, %v542, -inf
        %v548 = vmax.f32 %v544, %v545
        %v549 = vmax.f32 %v546, %v547
        %v550 = vmax.f32 %v548, %v549
        %551 = vmax.xlane.f32.xlu0 %v550
        %v552 = vpop.xlane.xlu0 %551
        %v553 = vrot.slane %v552, 4
        %v554 = vmax.f32 %v552, %v553
        %v555 = vrot.slane %v554, 2
        %v556 = vmax.f32 %v554, %v555
        %v557 = vrot.slane %v556, 1
        %v558 = vmax.f32 %v556, %v557
        %s559 = vtos %v558
        %v560 = vstv %s559
        %v561 = vsub.f32 %v539, %v560
        %v562 = vsub.f32 %v540, %v560
        %v563 = vsub.f32 %v541, %v560
        %v564 = vsub.f32 %v542, %v560
        %v565 = vmul.f32 %v561, 1.442695
        %v566 = vpow.pop %v565
        %v567 = vmul.f32 %v562, 1.442695
        %v568 = vpow.pop %v567
        %v569 = vmul.f32 %v563, 1.442695
        %v570 = vpow.pop %v569
        %v571 = vmul.f32 %v564, 1.442695
        %v572 = vpow.pop %v571
        %v573 = vsel %vm543, %v566, 0.0
        %v574 = vsel %vm543, %v568, 0.0
        %v575 = vadd.f32 %v573, %v574
        %v576 = vsel %vm543, %v570, 0.0
        %v577 = vadd.f32 %v575, %v576
        %v578 = vsel %vm543, %v572, 0.0
        %v579 = vadd.f32 %v577, %v578
        %580 = vadd.xlane.f32.xlu0 %v579
        %v581 = vpop.xlane.xlu0 %580
        %v582 = vrot.slane %v581, 4
        %v583 = vadd.f32 %v581, %v582
        %v584 = vrot.slane %v583, 2
        %v585 = vadd.f32 %v583, %v584
        %v586 = vrot.slane %v585, 1
        %v587 = vadd.f32 %v585, %v586
        %s588 = vtos %v587
        %v589 = vstv %s588
        %v590 = vlog2.pop %v589
        %v591 = vmul.f32 %v590, 0.6931472
        %s592 = vtos %v591
        %s593 = sadd.f32 %s559, %s592
        %v594 = vstv %s593
        %v595 = vsub.f32 %v517, %v594
        %v596 = vsub.f32 %v522, %v594
        %v597 = vsub.f32 %v527, %v594
        %v598 = vsub.f32 %v532, %v594
        %v599 = vld [vmem:[%s317] sm:$0xff]
        %v600 = vld [vmem:[%s317 + $0x8] sm:$0xff]
        %v601 = vld [vmem:[%s317 + $0x10] sm:$0xff]
        %v602 = vld [vmem:[%s317 + $0x18] sm:$0xff]
        %v604 = vsel %vm543, %v595, 0
        %v607 = vsel %vm543, %v596, 0
        %v610 = vsel %vm543, %v597, 0
        %v613 = vsel %vm543, %v598, 0
        %615 = vmatprep.subr.mxu0 0.0
        %616 = vmatpush1.msra.mxu0 %v599
        %617 = vmatprep.subr.mxu0 0.0
        %618 = vmatpush1.msra.mxu0 %v600
        %619 = vmatprep.subr.mxu0 0.0
        %620 = vmatpush1.msra.mxu0 %v601
        %621 = vmatprep.subr.mxu0 0.0
        %622 = vmatpush1.msra.mxu0 %v602
        %623 = vmatprep.subr.mxu0 0.0
        %624 = vmatpush1.msra.mxu0 0.0
        %625 = vmatprep.subr.mxu0 0.0
        %626 = vmatpush1.msra.mxu0 0.0
        %627 = vmatprep.subr.mxu0 0.0
        %628 = vmatpush1.msra.mxu0 0.0
        %629 = vmatprep.subr.mxu0 0.0
        %630 = vmatpush1.msra.mxu0 0.0
        %631 = vmatprep.subr.mxu0 0.0
        %632 = vmatpush1.msra.mxu0 0.0
        %633 = vmatprep.subr.mxu0 0.0
        %634 = vmatpush1.msra.mxu0 0.0
        %635 = vmatprep.subr.mxu0 0.0
        %636 = vmatpush1.msra.mxu0 0.0
        %637 = vmatprep.subr.mxu0 0.0
        %638 = vmatpush1.msra.mxu0 0.0
        %639 = vmatprep.subr.mxu0 0.0
        %640 = vmatpush1.msra.mxu0 0.0
        %641 = vmatprep.subr.mxu0 0.0
        %642 = vmatpush1.msra.mxu0 0.0
        %643 = vmatprep.subr.mxu0 0.0
        %644 = vmatpush1.msra.mxu0 0.0
        %645 = vmatprep.subr.mxu0 0.0
        %646 = vmatpush1.msra.mxu0 0.0
        %647 = vmatprep.subr.mxu0 0.0
        %648 = vmatpush1.msra.mxu0 0.0
        %649 = vmatprep.subr.mxu0 0.0
        %650 = vmatpush1.msra.mxu0 0.0
        %651 = vmatprep.subr.mxu0 0.0
        %652 = vmatpush1.msra.mxu0 0.0
        %653 = vmatprep.subr.mxu0 0.0
        %654 = vmatpush1.msra.mxu0 0.0
        %655 = vmatprep.subr.mxu0 0.0
        %656 = vmatpush1.msra.mxu0 0.0
        %657 = vmatprep.subr.mxu0 0.0
        %658 = vmatpush1.msra.mxu0 0.0
        %659 = vmatprep.subr.mxu0 0.0
        %660 = vmatpush1.msra.mxu0 0.0
        %661 = vmatprep.subr.mxu0 0.0
        %662 = vmatpush1.msra.mxu0 0.0
        %663 = vmatprep.subr.mxu0 0.0
        %664 = vmatpush1.msra.mxu0 0.0
        %665 = vmatprep.subr.mxu0 0.0
        %666 = vmatpush1.msra.mxu0 0.0
        %667 = vmatprep.subr.mxu0 0.0
        %668 = vmatpush1.msra.mxu0 0.0
        %669 = vmatprep.subr.mxu0 0.0
        %670 = vmatpush1.msra.mxu0 0.0
        %671 = vmatprep.subr.mxu0 0.0
        %672 = vmatpush1.msra.mxu0 0.0
        %673 = vmatprep.subr.mxu0 0.0
        %674 = vmatpush1.msra.mxu0 0.0
        %675 = vmatprep.subr.mxu0 0.0
        %676 = vmatpush1.msra.mxu0 0.0
        %677 = vmatprep.subr.mxu0 0.0
        %678 = vmatpush1.msra.mxu0 0.0
        %679 = vmatprep.mubr.f32.mxu0 0.0
        %680 = vmatmul.mubr.f32.gmra.mrb[0].mxu0 %v604
        %v681 = vpop.f32.mrb[0].mxu0
        %v682 = vadd.f32 0.0, %v681
        %v683 = vpop.f32.mrb[0].mxu0
        %684 = vmatprep.mubr.f32.mxu0 0.0
        %685 = vmatmul.mubr.f32.gmra.mrb[0].mxu0 %v607
        %v686 = vpop.f32.mrb[0].mxu0
        %v687 = vadd.f32 0.0, %v686
        %v688 = vpop.f32.mrb[0].mxu0
        %689 = vmatprep.mubr.f32.mxu0 0.0
        %690 = vmatmul.mubr.f32.gmra.mrb[0].mxu0 %v610
        %v691 = vpop.f32.mrb[0].mxu0
        %v692 = vadd.f32 0.0, %v691
        %v693 = vpop.f32.mrb[0].mxu0
        %694 = vmatprep.mubr.f32.mxu0 0.0
        %695 = vmatmul.mubr.f32.gmra.mrb[0].mxu0 %v613
        %v696 = vpop.f32.mrb[0].mxu0
        %v697 = vadd.f32 0.0, %v696
        %v698 = vpop.f32.mrb[0].mxu0
        %699 = vdwg.mxu0
        %v700 = vld [vmem:[%s4] sm:$0xff]
        %v701 = vld [vmem:[%s4 + $0x8] sm:$0xff]
        %v702 = vld [vmem:[%s4 + $0x10] sm:$0xff]
        %v703 = vld [vmem:[%s4 + $0x18] sm:$0xff]
        %v704 = vld [vmem:[%s4 + $0x20] sm:$0xff]
        %v705 = vld [vmem:[%s4 + $0x28] sm:$0xff]
        %v706 = vld [vmem:[%s4 + $0x30] sm:$0xff]
        %v707 = vld [vmem:[%s4 + $0x38] sm:$0xff]
        %v708 = vld [vmem:[%s4 + $0x40] sm:$0xff]
        %v709 = vld [vmem:[%s4 + $0x48] sm:$0xff]
        %v710 = vld [vmem:[%s4 + $0x50] sm:$0xff]
        %v711 = vld [vmem:[%s4 + $0x58] sm:$0xff]
        %v712 = vld [vmem:[%s4 + $0x60] sm:$0xff]
        %v713 = vld [vmem:[%s4 + $0x68] sm:$0xff]
        %v714 = vld [vmem:[%s4 + $0x70] sm:$0xff]
        %v715 = vld [vmem:[%s4 + $0x78] sm:$0xff]
        %v717 = vsel %vm543, %v700, 0
        %v720 = vsel %vm543, %v701, 0
        %v723 = vsel %vm543, %v702, 0
        %v726 = vsel %vm543, %v703, 0
        %v729 = vsel %vm543, %v704, 0
        %v732 = vsel %vm543, %v705, 0
        %v735 = vsel %vm543, %v706, 0
        %v738 = vsel %vm543, %v707, 0
        %v741 = vsel %vm543, %v708, 0
        %v744 = vsel %vm543, %v709, 0
        %v747 = vsel %vm543, %v710, 0
        %v750 = vsel %vm543, %v711, 0
        %v753 = vsel %vm543, %v712, 0
        %v756 = vsel %vm543, %v713, 0
        %v759 = vsel %vm543, %v714, 0
        %v762 = vsel %vm543, %v715, 0
        %764 = vmatprep.subr.mxu0 0.0
        %765 = vmatpush1.msra.mxu0 %v682
        %766 = vmatprep.subr.mxu0 0.0
        %767 = vmatpush1.msra.mxu0 %v687
        %768 = vmatprep.subr.mxu0 0.0
        %769 = vmatpush1.msra.mxu0 %v692
        %770 = vmatprep.subr.mxu0 0.0
        %771 = vmatpush1.msra.mxu0 %v697
        %772 = vmatprep.subr.mxu0 0.0
        %773 = vmatpush1.msra.mxu0 0.0
        %774 = vmatprep.subr.mxu0 0.0
        %775 = vmatpush1.msra.mxu0 0.0
        %776 = vmatprep.subr.mxu0 0.0
        %777 = vmatpush1.msra.mxu0 0.0
        %778 = vmatprep.subr.mxu0 0.0
        %779 = vmatpush1.msra.mxu0 0.0
        %780 = vmatprep.subr.mxu0 0.0
        %781 = vmatpush1.msra.mxu0 0.0
        %782 = vmatprep.subr.mxu0 0.0
        %783 = vmatpush1.msra.mxu0 0.0
        %784 = vmatprep.subr.mxu0 0.0
        %785 = vmatpush1.msra.mxu0 0.0
        %786 = vmatprep.subr.mxu0 0.0
        %787 = vmatpush1.msra.mxu0 0.0
        %788 = vmatprep.subr.mxu0 0.0
        %789 = vmatpush1.msra.mxu0 0.0
        %790 = vmatprep.subr.mxu0 0.0
        %791 = vmatpush1.msra.mxu0 0.0
        %792 = vmatprep.subr.mxu0 0.0
        %793 = vmatpush1.msra.mxu0 0.0
        %794 = vmatprep.subr.mxu0 0.0
        %795 = vmatpush1.msra.mxu0 0.0
        %796 = vmatprep.subr.mxu0 0.0
        %797 = vmatpush1.msra.mxu0 0.0
        %798 = vmatprep.subr.mxu0 0.0
        %799 = vmatpush1.msra.mxu0 0.0
        %800 = vmatprep.subr.mxu0 0.0
        %801 = vmatpush1.msra.mxu0 0.0
        %802 = vmatprep.subr.mxu0 0.0
        %803 = vmatpush1.msra.mxu0 0.0
        %804 = vmatprep.subr.mxu0 0.0
        %805 = vmatpush1.msra.mxu0 0.0
        %806 = vmatprep.subr.mxu0 0.0
        %807 = vmatpush1.msra.mxu0 0.0
        %808 = vmatprep.subr.mxu0 0.0
        %809 = vmatpush1.msra.mxu0 0.0
        %810 = vmatprep.subr.mxu0 0.0
        %811 = vmatpush1.msra.mxu0 0.0
        %812 = vmatprep.subr.mxu0 0.0
        %813 = vmatpush1.msra.mxu0 0.0
        %814 = vmatprep.subr.mxu0 0.0
        %815 = vmatpush1.msra.mxu0 0.0
        %816 = vmatprep.subr.mxu0 0.0
        %817 = vmatpush1.msra.mxu0 0.0
        %818 = vmatprep.subr.mxu0 0.0
        %819 = vmatpush1.msra.mxu0 0.0
        %820 = vmatprep.subr.mxu0 0.0
        %821 = vmatpush1.msra.mxu0 0.0
        %822 = vmatprep.subr.mxu0 0.0
        %823 = vmatpush1.msra.mxu0 0.0
        %824 = vmatprep.subr.mxu0 0.0
        %825 = vmatpush1.msra.mxu0 0.0
        %826 = vmatprep.subr.mxu0 0.0
        %827 = vmatpush1.msra.mxu0 0.0
        %828 = vmatprep.mubr.f32.mxu0 0.0
        %829 = vmatmul.mubr.f32.gmra.mrb[0].mxu0 %v717
        %v830 = vpop.f32.mrb[0].mxu0
        %v831 = vadd.f32 0.0, %v830
        %v832 = vpop.f32.mrb[0].mxu0
        %833 = vmatprep.mubr.f32.mxu0 0.0
        %834 = vmatmul.mubr.f32.gmra.mrb[0].mxu0 %v720
        %v835 = vpop.f32.mrb[0].mxu0
        %v836 = vadd.f32 0.0, %v835
        %v837 = vpop.f32.mrb[0].mxu0
        %838 = vmatprep.mubr.f32.mxu0 0.0
        %839 = vmatmul.mubr.f32.gmra.mrb[0].mxu0 %v723
        %v840 = vpop.f32.mrb[0].mxu0
        %v841 = vadd.f32 0.0, %v840
        %v842 = vpop.f32.mrb[0].mxu0
        %843 = vmatprep.mubr.f32.mxu0 0.0
        %844 = vmatmul.mubr.f32.gmra.mrb[0].mxu0 %v726
        %v845 = vpop.f32.mrb[0].mxu0
        %v846 = vadd.f32 0.0, %v845
        %v847 = vpop.f32.mrb[0].mxu0
        %848 = vmatprep.mubr.f32.mxu0 0.0
        %849 = vmatmul.mubr.f32.gmra.mrb[0].mxu0 %v729
        %v850 = vpop.f32.mrb[0].mxu0
        %v851 = vadd.f32 0.0, %v850
        %v852 = vpop.f32.mrb[0].mxu0
        %853 = vmatprep.mubr.f32.mxu0 0.0
        %854 = vmatmul.mubr.f32.gmra.mrb[0].mxu0 %v732
        %v855 = vpop.f32.mrb[0].mxu0
        %v856 = vadd.f32 0.0, %v855
        %v857 = vpop.f32.mrb[0].mxu0
        %858 = vmatprep.mubr.f32.mxu0 0.0
        %859 = vmatmul.mubr.f32.gmra.mrb[0].mxu0 %v735
        %v860 = vpop.f32.mrb[0].mxu0
        %v861 = vadd.f32 0.0, %v860
        %v862 = vpop.f32.mrb[0].mxu0
        %863 = vmatprep.mubr.f32.mxu0 0.0
        %864 = vmatmul.mubr.f32.gmra.mrb[0].mxu0 %v738
        %v865 = vpop.f32.mrb[0].mxu0
        %v866 = vadd.f32 0.0, %v865
        %v867 = vpop.f32.mrb[0].mxu0
        %868 = vmatprep.mubr.f32.mxu0 0.0
        %869 = vmatmul.mubr.f32.gmra.mrb[0].mxu0 %v741
        %v870 = vpop.f32.mrb[0].mxu0
        %v871 = vadd.f32 0.0, %v870
        %v872 = vpop.f32.mrb[0].mxu0
        %873 = vmatprep.mubr.f32.mxu0 0.0
        %874 = vmatmul.mubr.f32.gmra.mrb[0].mxu0 %v744
        %v875 = vpop.f32.mrb[0].mxu0
        %v876 = vadd.f32 0.0, %v875
        %v877 = vpop.f32.mrb[0].mxu0
        %878 = vmatprep.mubr.f32.mxu0 0.0
        %879 = vmatmul.mubr.f32.gmra.mrb[0].mxu0 %v747
        %v880 = vpop.f32.mrb[0].mxu0
        %v881 = vadd.f32 0.0, %v880
        %v882 = vpop.f32.mrb[0].mxu0
        %883 = vmatprep.mubr.f32.mxu0 0.0
        %884 = vmatmul.mubr.f32.gmra.mrb[0].mxu0 %v750
        %v885 = vpop.f32.mrb[0].mxu0
        %v886 = vadd.f32 0.0, %v885
        %v887 = vpop.f32.mrb[0].mxu0
        %888 = vmatprep.mubr.f32.mxu0 0.0
        %889 = vmatmul.mubr.f32.gmra.mrb[0].mxu0 %v753
        %v890 = vpop.f32.mrb[0].mxu0
        %v891 = vadd.f32 0.0, %v890
        %v892 = vpop.f32.mrb[0].mxu0
        %893 = vmatprep.mubr.f32.mxu0 0.0
        %894 = vmatmul.mubr.f32.gmra.mrb[0].mxu0 %v756
        %v895 = vpop.f32.mrb[0].mxu0
        %v896 = vadd.f32 0.0, %v895
        %v897 = vpop.f32.mrb[0].mxu0
        %898 = vmatprep.mubr.f32.mxu0 0.0
        %899 = vmatmul.mubr.f32.gmra.mrb[0].mxu0 %v759
        %v900 = vpop.f32.mrb[0].mxu0
        %v901 = vadd.f32 0.0, %v900
        %v902 = vpop.f32.mrb[0].mxu0
        %903 = vmatprep.mubr.f32.mxu0 0.0
        %904 = vmatmul.mubr.f32.gmra.mrb[0].mxu0 %v762
        %v905 = vpop.f32.mrb[0].mxu0
        %v906 = vadd.f32 0.0, %v905
        %v907 = vpop.f32.mrb[0].mxu0
        %908 = vdwg.mxu0
        %909 = vst [vmem:[%s313] sm:$0xff] %v831
        %910 = vst [vmem:[%s313 + $0x8] sm:$0xff] %v836
        %911 = vst [vmem:[%s313 + $0x10] sm:$0xff] %v841
        %912 = vst [vmem:[%s313 + $0x18] sm:$0xff] %v846
        %913 = vst [vmem:[%s313 + $0x20] sm:$0xff] %v851
        %914 = vst [vmem:[%s313 + $0x28] sm:$0xff] %v856
        %915 = vst [vmem:[%s313 + $0x30] sm:$0xff] %v861
        %916 = vst [vmem:[%s313 + $0x38] sm:$0xff] %v866
        %917 = vst [vmem:[%s313 + $0x40] sm:$0xff] %v871
        %918 = vst [vmem:[%s313 + $0x48] sm:$0xff] %v876
        %919 = vst [vmem:[%s313 + $0x50] sm:$0xff] %v881
        %920 = vst [vmem:[%s313 + $0x58] sm:$0xff] %v886
        %921 = vst [vmem:[%s313 + $0x60] sm:$0xff] %v891
        %922 = vst [vmem:[%s313 + $0x68] sm:$0xff] %v896
        %923 = vst [vmem:[%s313 + $0x70] sm:$0xff] %v901
        %924 = vst [vmem:[%s313 + $0x78] sm:$0xff] %v906
        %s925 = sand.u32 %s205, 1
        %s926 = scalar_lea.sflag [#allocation3], %s925
        %s927 = sand.u32 %s205, 1
        %s928 = smul.addr %s927, 128
        %s929 = scalar_lea.vmem [#allocation2], %s928
        // Predicated region
        $region49: #{tpu_custom_call.1} parent=47 // pred_check
          %p930 = pneg %p215
        $region50: #{tpu_custom_call.1} parent=47 // pred_check_branch
          %932 = sbr.rel (%p930) target = $region52
        $region51: #{tpu_custom_call.1} parent=47 // pred_region
          %s934 = ssub.s32 2048, 2048
          %935 = vsyncadd %s926, %s934
          %s936 = smul.addr %s25, 16
          %s937 = sadd.s32 %s26, %s936
          %s938 = smul.addr %s937, 128
          %s939 = scalar_lea.hbm %s7, %s938
          %s940 = sshll.u32 %s929, 4
          %s941 = int_to_ptr.vmem [resolvable:$true] %s940
          %946 = dma.vmem_to_hbm [thread:$0]  %s941, 2048, %s939, %s926, 128, 128, 8
        $region52: #{tpu_custom_call.1} parent=47 // pred_fallthru
          _
      $region48: #{tpu_custom_call.1} parent=5 // pred_fallthru
        _
      %p947 = scmp.le.s32.totalorder 2, %s16
      // Predicated region
      $region53: #{tpu_custom_call.1} parent=5 // pred_check
        %p948 = pneg %p947
      $region54: #{tpu_custom_call.1} parent=5 // pred_check_branch
        %950 = sbr.rel (%p948) target = $region56
      $region55: #{tpu_custom_call.1} parent=5 // pred_region
        %s951 = ssub.s32 %s16, 2
        // Predicated region
        $region57: #{tpu_custom_call.1} parent=55 // pred_check
          %p952 = pneg %p221
        $region58: #{tpu_custom_call.1} parent=55 // pred_check_branch
          %954 = sbr.rel (%p952) target = $region60
        $region59: #{tpu_custom_call.1} parent=55 // pred_region
          %s955 = sand.u32 %s206, 1
          %s956 = scalar_lea.sflag [#allocation3], %s955
          %s957 = sand.u32 %s206, 1
          %s958 = smul.addr %s957, 128
          %s959 = scalar_lea.vmem [#allocation2], %s958
          %960 = dma.done %s956, 2048
        $region60: #{tpu_custom_call.1} parent=55 // pred_fallthru
          _
      $region56: #{tpu_custom_call.1} parent=5 // pred_fallthru
        _
    $region6: #{tpu_custom_call.1} parent=1 // loop_footer
      %s20 = sadd.s32 1, %s16
    $region7: #{tpu_custom_call.1} parent=1 // loop_footer_branch
      %15 = sbr.rel target = $region3
    $region8: #{tpu_custom_call.1} parent=1 // loop_exit
      _
    %961 = vsyncpa [#allocation3], 1
    %s962 = scalar_lea.sflag [#allocation3], 1
    %963 = vsyncpa %s962, 1

</llo_original>
